<compile_context>
chip_gen: v7x
topology: tpu7x:2x2x1
jax: 0.10.0
libtpu: 0.0.40
codegen_flags: <defaults>
</compile_context>

<pallas_src>
import functools

import jax
import jax.numpy as jnp
from jax.experimental import pallas as pl
from jax.experimental.pallas import tpu as pltpu


def _shift_right(v, s):
    """v shifted right by s along the last (time/lane) axis, zero-filled."""
    if s == 0:
        return v
    L = v.shape[-1]
    zeros = jnp.zeros(v.shape[:-1] + (s,), v.dtype)
    return jnp.concatenate([zeros, v[..., : L - s]], axis=-1)


def _stack_taps(v, K, dilation):
    """(C, L) -> (K*C, L): tap k is v shifted right by (K-1-k)*dilation.

    Matches a causal conv with left zero padding of (K-1)*dilation:
      out[o, t] = sum_{k,c} W[o, c, k] * v[c, t - (K-1-k)*dilation]  (0 if t<shift)
    so a single matmul with the (C_out, K*C) fused weight computes all taps.
    """
    parts = [_shift_right(v, (K - 1 - k) * dilation) for k in range(K)]
    return jnp.concatenate(parts, axis=0)


def _temporal_block_kernel(x_ref, w1_ref, b1_ref, w2_ref, b2_ref, *rest,
                           B, K, dilation, has_downsample, mxu_dtype):
    # x_ref : (B, C_in, L)        block of B batch elements
    # w1_ref: (C_out, K*C_in)     conv1 effective (weight-normed) taps, fused
    # w2_ref: (C_out, K*C_out)    conv2 effective taps, fused
    # b*_ref: (C_out, 1)          biases
    # wd_ref: (C_out, C_in), bd_ref: (C_out, 1)   only when C_in != C_out
    # o_ref : (B, C_out, L)
    if has_downsample:
        wd_ref, bd_ref, o_ref = rest
    else:
        (o_ref,) = rest

    if mxu_dtype == jnp.float32:
        cast = lambda a: a
    else:
        cast = lambda a: a.astype(mxu_dtype)  # bf16 MXU inputs; f32 accum/epilogue

    # Hoist the step-constant weights out of the batch loop.
    w1 = cast(w1_ref[...])
    w2 = cast(w2_ref[...])
    b1 = b1_ref[...]
    b2 = b2_ref[...]
    if has_downsample:
        wd = cast(wd_ref[...])
        bd = bd_ref[...]

    for b in range(B):                        # B is a small static block -> unrolled
        x = x_ref[b]                          # (C_in, L) f32

        # conv1: all K taps in one wide-contraction matmul, + bias + ReLU
        xs = _stack_taps(x, K, dilation)      # (K*C_in, L)
        h = jnp.dot(w1, cast(xs), preferred_element_type=jnp.float32)
        h = jnp.maximum(h + b1, 0.0)          # nn.Dropout is identity at inference

        # conv2
        hs = _stack_taps(h, K, dilation)      # (K*C_out, L)
        out = jnp.dot(w2, cast(hs), preferred_element_type=jnp.float32)
        out = jnp.maximum(out + b2, 0.0)

        # residual: 1x1 conv when C_in != C_out, otherwise identity (no matmul)
        if has_downsample:
            res = jnp.dot(wd, cast(x), preferred_element_type=jnp.float32) + bd
        else:
            res = x

        o_ref[b] = jnp.maximum(out + res, 0.0).astype(o_ref.dtype)


def _pick_batch_block(N, C_in, C_out, K, L, budget_bytes=8 << 20, max_block=8):
    """Largest batch block (divisor of N, capped) whose f32 working set stays
    comfortably under the scoped-VMEM default (smallest budget is v7x)."""
    act = 4 * L * (C_in + K * C_in + 2 * C_out + K * C_out + 2 * C_out)
    dma = 2 * 4 * L * (C_in + C_out)          # double-buffered in/out blocks
    per_b = act + dma
    bb = int(max(1, min(N, max_block, budget_bytes // max(per_b, 1))))
    while N % bb:
        bb -= 1
    return bb


def fuse_conv_taps(w_ock):
    """(C_out, C_in, K) effective conv taps -> (C_out, K*C_in) fused layout
    with index [o, k*C_in + c]."""
    co, ci, kk = w_ock.shape
    return jnp.transpose(w_ock, (0, 2, 1)).reshape(co, kk * ci)


def weight_norm_effective(g, v):
    """Materialize weight_norm's effective weight g * v / ||v|| (per out
    channel, norm over remaining dims). Use this when importing trained
    PyTorch (g, v) checkpoints; at init g == ||v|| so it equals v."""
    norm = jnp.sqrt(jnp.sum(v * v, axis=tuple(range(1, v.ndim)), keepdims=True))
    return g.reshape((-1,) + (1,) * (v.ndim - 1)) * v / norm


def temporal_block(x, params, *, kernel_size, stride, dilation, padding,
                   mxu_dtype=jnp.float32, batch_block=None):
    """x: (N, C_in, L) float32. params: (w1, b1, w2, b2, wd, bd) in the fused
    kernel layout (wd/bd are None when C_in == C_out, i.e. identity residual)."""
    assert stride == 1, "TCN TemporalBlock is used with stride=1"
    N, C_in, L = x.shape
    # The module only preserves length L (and the residual add only typechecks)
    # when padding == (kernel_size-1)*dilation; reject anything else so the
    # shifted-slice formulation can never read out of bounds silently.
    assert padding == (kernel_size - 1) * dilation, (
        "TemporalBlock requires padding == (kernel_size - 1) * dilation")

    w1, b1, w2, b2, wd, bd = params
    C_out = w1.shape[0]
    has_downsample = wd is not None
    assert has_downsample == (C_in != C_out), \
        "downsample params must be present iff C_in != C_out"

    if batch_block is None:
        batch_block = _pick_batch_block(N, C_in, C_out, kernel_size, L)
    assert N % batch_block == 0, "batch_block must divide N"

    kernel = functools.partial(
        _temporal_block_kernel, B=batch_block, K=kernel_size,
        dilation=dilation, has_downsample=has_downsample, mxu_dtype=mxu_dtype)

    def const2d(shape):
        return pl.BlockSpec(shape, lambda n: (0, 0))

    in_specs = [
        pl.BlockSpec((batch_block, C_in, L), lambda n: (n, 0, 0)),
        const2d((C_out, kernel_size * C_in)),
        const2d((C_out, 1)),
        const2d((C_out, kernel_size * C_out)),
        const2d((C_out, 1)),
    ]
    operands = [x, w1, b1, w2, b2]
    if has_downsample:
        in_specs += [const2d((C_out, C_in)), const2d((C_out, 1))]
        operands += [wd, bd]

    return pl.pallas_call(
        kernel,
        out_shape=jax.ShapeDtypeStruct((N, C_out, L), x.dtype),
        grid_spec=pltpu.PrefetchScalarGridSpec(
            num_scalar_prefetch=0,
            grid=(N // batch_block,),
            in_specs=in_specs,
            out_specs=pl.BlockSpec((batch_block, C_out, L),
                                   lambda n: (n, 0, 0)),
        ),
        compiler_params=pltpu.CompilerParams(
            dimension_semantics=("parallel",)),
    )(*operands)


def init_params(key, n_inputs, n_outputs, kernel_size):
    """Deterministic synthetic parameters in the kernel's fused layout.

    The PyTorch module stores weight_norm(Conv2d) params (g, v); the kernel
    consumes the *effective* weight g*v/||v||, materialized host-side via
    weight_norm_effective (at init g == ||v||). init_weights() draws conv
    weights N(0, 0.01); biases follow PyTorch's default U(+-1/sqrt(fan_in)).
    """
    kv1, kv2, kvd, kb1, kb2, kbd = jax.random.split(key, 6)

    def bias(k, fan_in, n_out):
        bound = 1.0 / jnp.sqrt(jnp.float32(fan_in))
        return jax.random.uniform(k, (n_out, 1), jnp.float32, -bound, bound)

    def eff(v):  # weight_norm with g initialized to ||v|| per out channel
        g = jnp.sqrt(jnp.sum(v * v, axis=tuple(range(1, v.ndim))))
        return weight_norm_effective(g, v)

    v1 = 0.01 * jax.random.normal(kv1, (n_outputs, n_inputs, kernel_size), jnp.float32)
    w1 = fuse_conv_taps(eff(v1))
    b1 = bias(kb1, n_inputs * kernel_size, n_outputs)

    v2 = 0.01 * jax.random.normal(kv2, (n_outputs, n_outputs, kernel_size), jnp.float32)
    w2 = fuse_conv_taps(eff(v2))
    b2 = bias(kb2, n_outputs * kernel_size, n_outputs)

    if n_inputs != n_outputs:
        wd = 0.01 * jax.random.normal(kvd, (n_outputs, n_inputs), jnp.float32)
        bd = bias(kbd, n_inputs, n_outputs)
    else:
        wd, bd = None, None   # identity residual
    return (w1, b1, w2, b2, wd, bd)


def reference_forward(x, params, *, kernel_size, dilation, padding):
    """Pure-JAX reference of the PyTorch forward (inference mode), written with
    explicit left zero padding + per-tap slices (independent of the kernel's
    shift/stack formulation)."""
    w1, b1, w2, b2, wd, bd = params
    N, C_in, L = x.shape
    C_out = w1.shape[0]

    def causal_conv(inp, w_fused, b):
        C = inp.shape[1]
        w = w_fused.reshape(C_out, kernel_size, C)   # [o, k, c]
        xp = jnp.pad(inp, ((0, 0), (0, 0), (padding, 0)))
        acc = sum(jnp.einsum('oc,ncl->nol', w[:, k, :],
                             xp[:, :, k * dilation:k * dilation + L])
                  for k in range(kernel_size))
        return acc + b[None, :, :]

    h = jnp.maximum(causal_conv(x, w1, b1), 0.0)
    out = jnp.maximum(causal_conv(h, w2, b2), 0.0)
    if wd is not None:
        res = jnp.einsum('oc,ncl->nol', wd, x) + bd[None, :, :]
    else:
        res = x
    return jnp.maximum(out + res, 0.0)


if __name__ == "__main__":
    key = jax.random.PRNGKey(0)

    def run_case(n, c_in, c_out, ksize, dilation, length, batch_block=None):
        padding = (ksize - 1) * dilation
        kx, kp = jax.random.split(jax.random.fold_in(key, 131 * c_in + c_out))
        x = jax.random.normal(kx, (n, c_in, length), jnp.float32)
        params = init_params(kp, c_in, c_out, ksize)
        out = temporal_block(x, params, kernel_size=ksize, stride=1,
                             dilation=dilation, padding=padding,
                             batch_block=batch_block)
        out = jax.block_until_ready(out)
        ref = reference_forward(x, params, kernel_size=ksize,
                                dilation=dilation, padding=padding)
        assert out.shape == (n, c_out, length)
        err = jnp.max(jnp.abs(out - ref))
        assert jnp.allclose(out, ref, atol=1e-5, rtol=1e-5), f"max err {err}"

    # 1) C_in != C_out: exercises the 1x1 downsample residual, batch-blocked grid.
    run_case(n=2, c_in=4, c_out=8, ksize=3, dilation=1, length=128)
    # 2) C_in == C_out: identity residual is statically skipped; batch_block=1
    #    exercises a multi-step "parallel" grid and dilation=2.
    run_case(n=2, c_in=8, c_out=8, ksize=3, dilation=2, length=128, batch_block=1)

    # TODO(synk): nn.Dropout training-mode masking is not implemented (inference
    # semantics only); weight_norm (g, v) must be folded via weight_norm_effective
    # before calling the kernel when loading trained checkpoints.
    print("KERNEL_OK")
</pallas_src>

<mosaic_0001>
module attributes {stable_mosaic.version = 11 : i64} {
  func.func @_temporal_block_kernel(%arg0: i32, %arg1: memref<2x4x128xf32, #tpu.memory_space<vmem>>, %arg2: memref<8x12xf32, #tpu.memory_space<vmem>>, %arg3: memref<8x1xf32, #tpu.memory_space<vmem>>, %arg4: memref<8x24xf32, #tpu.memory_space<vmem>>, %arg5: memref<8x1xf32, #tpu.memory_space<vmem>>, %arg6: memref<8x4xf32, #tpu.memory_space<vmem>>, %arg7: memref<8x1xf32, #tpu.memory_space<vmem>>, %arg8: memref<2x8x128xf32, #tpu.memory_space<vmem>>) attributes {dimension_semantics = [#tpu.dimension_semantics<parallel>], iteration_bounds = array<i64: 1>, scalar_prefetch = 0 : i64, scratch_operands = 0 : i64, tpu.core_type = #tpu.core_type<tc>, window_params = [{transform_indices = @transform_0, window_bounds = array<i64: 2, 4, 128>}, {pipeline_mode = #tpu.pipeline_mode<synchronous>, transform_indices = @transform_1, window_bounds = array<i64: 8, 12>}, {pipeline_mode = #tpu.pipeline_mode<synchronous>, transform_indices = @transform_2, window_bounds = array<i64: 8, 1>}, {pipeline_mode = #tpu.pipeline_mode<synchronous>, transform_indices = @transform_3, window_bounds = array<i64: 8, 24>}, {pipeline_mode = #tpu.pipeline_mode<synchronous>, transform_indices = @transform_4, window_bounds = array<i64: 8, 1>}, {pipeline_mode = #tpu.pipeline_mode<synchronous>, transform_indices = @transform_5, window_bounds = array<i64: 8, 4>}, {pipeline_mode = #tpu.pipeline_mode<synchronous>, transform_indices = @transform_6, window_bounds = array<i64: 8, 1>}, {transform_indices = @transform_7, window_bounds = array<i64: 2, 8, 128>}]} {
    %c0 = arith.constant 0 : index
    %c0_0 = arith.constant 0 : index
    %0 = vector.load %arg2[%c0, %c0_0] : memref<8x12xf32, #tpu.memory_space<vmem>>, vector<8x12xf32>
    %c0_1 = arith.constant 0 : index
    %c0_2 = arith.constant 0 : index
    %1 = vector.load %arg4[%c0_1, %c0_2] : memref<8x24xf32, #tpu.memory_space<vmem>>, vector<8x24xf32>
    %c0_3 = arith.constant 0 : index
    %c0_4 = arith.constant 0 : index
    %2 = vector.load %arg3[%c0_3, %c0_4] : memref<8x1xf32, #tpu.memory_space<vmem>>, vector<8x1xf32>
    %c0_5 = arith.constant 0 : index
    %c0_6 = arith.constant 0 : index
    %3 = vector.load %arg5[%c0_5, %c0_6] : memref<8x1xf32, #tpu.memory_space<vmem>>, vector<8x1xf32>
    %c0_7 = arith.constant 0 : index
    %c0_8 = arith.constant 0 : index
    %4 = vector.load %arg6[%c0_7, %c0_8] : memref<8x4xf32, #tpu.memory_space<vmem>>, vector<8x4xf32>
    %c0_9 = arith.constant 0 : index
    %c0_10 = arith.constant 0 : index
    %5 = vector.load %arg7[%c0_9, %c0_10] : memref<8x1xf32, #tpu.memory_space<vmem>>, vector<8x1xf32>
    %c0_11 = arith.constant 0 : index
    %c0_12 = arith.constant 0 : index
    %c0_13 = arith.constant 0 : index
    %6 = vector.load %arg1[%c0_11, %c0_12, %c0_13] : memref<2x4x128xf32, #tpu.memory_space<vmem>>, vector<1x4x128xf32>
    %7 = vector.shape_cast %6 : vector<1x4x128xf32> to vector<4x128xf32>
    %cst = arith.constant 0.000000e+00 : f32
    %8 = vector.broadcast %cst : f32 to vector<4x2xf32>
    %9 = vector.extract_strided_slice %7 {offsets = [0, 0], sizes = [4, 126], strides = [1, 1]} : vector<4x128xf32> to vector<4x126xf32>
    %10 = tpu.concatenate %8, %9 in 1 : vector<4x2xf32>, vector<4x126xf32> -> vector<4x128xf32>
    %cst_14 = arith.constant 0.000000e+00 : f32
    %11 = vector.broadcast %cst_14 : f32 to vector<4x1xf32>
    %12 = vector.extract_strided_slice %7 {offsets = [0, 0], sizes = [4, 127], strides = [1, 1]} : vector<4x128xf32> to vector<4x127xf32>
    %13 = tpu.concatenate %11, %12 in 1 : vector<4x1xf32>, vector<4x127xf32> -> vector<4x128xf32>
    %14 = tpu.concatenate %10, %13, %7 in 0 : vector<4x128xf32>, vector<4x128xf32>, vector<4x128xf32> -> vector<12x128xf32>
    %cst_15 = arith.constant dense<0.000000e+00> : vector<8x128xf32>
    %15 = tpu.matmul %0, %14, %cst_15 {dimension_numbers = #tpu.dot_dimension_numbers<[1], [0], [0], [1], [0, 0, 1, 1], [], []>} : vector<8x12xf32>, vector<12x128xf32>, vector<8x128xf32> -> vector<8x128xf32>
    %16 = vector.broadcast %2 : vector<8x1xf32> to vector<8x128xf32>
    %17 = arith.addf %15, %16 : vector<8x128xf32>
    %cst_16 = arith.constant 0.000000e+00 : f32
    %18 = vector.broadcast %cst_16 : f32 to vector<8x128xf32>
    %19 = arith.maximumf %17, %18 : vector<8x128xf32>
    %cst_17 = arith.constant 0.000000e+00 : f32
    %20 = vector.broadcast %cst_17 : f32 to vector<8x2xf32>
    %21 = vector.extract_strided_slice %19 {offsets = [0, 0], sizes = [8, 126], strides = [1, 1]} : vector<8x128xf32> to vector<8x126xf32>
    %22 = tpu.concatenate %20, %21 in 1 : vector<8x2xf32>, vector<8x126xf32> -> vector<8x128xf32>
    %cst_18 = arith.constant 0.000000e+00 : f32
    %23 = vector.broadcast %cst_18 : f32 to vector<8x1xf32>
    %24 = vector.extract_strided_slice %19 {offsets = [0, 0], sizes = [8, 127], strides = [1, 1]} : vector<8x128xf32> to vector<8x127xf32>
    %25 = tpu.concatenate %23, %24 in 1 : vector<8x1xf32>, vector<8x127xf32> -> vector<8x128xf32>
    %26 = tpu.concatenate %22, %25, %19 in 0 : vector<8x128xf32>, vector<8x128xf32>, vector<8x128xf32> -> vector<24x128xf32>
    %cst_19 = arith.constant dense<0.000000e+00> : vector<8x128xf32>
    %27 = tpu.matmul %1, %26, %cst_19 {dimension_numbers = #tpu.dot_dimension_numbers<[1], [0], [0], [1], [0, 0, 1, 1], [], []>} : vector<8x24xf32>, vector<24x128xf32>, vector<8x128xf32> -> vector<8x128xf32>
    %28 = vector.broadcast %3 : vector<8x1xf32> to vector<8x128xf32>
    %29 = arith.addf %27, %28 : vector<8x128xf32>
    %cst_20 = arith.constant 0.000000e+00 : f32
    %30 = vector.broadcast %cst_20 : f32 to vector<8x128xf32>
    %31 = arith.maximumf %29, %30 : vector<8x128xf32>
    %cst_21 = arith.constant dense<0.000000e+00> : vector<8x128xf32>
    %32 = tpu.matmul %4, %7, %cst_21 {dimension_numbers = #tpu.dot_dimension_numbers<[1], [0], [0], [1], [0, 0, 1, 1], [], []>} : vector<8x4xf32>, vector<4x128xf32>, vector<8x128xf32> -> vector<8x128xf32>
    %33 = vector.broadcast %5 : vector<8x1xf32> to vector<8x128xf32>
    %34 = arith.addf %32, %33 : vector<8x128xf32>
    %35 = arith.addf %31, %34 : vector<8x128xf32>
    %cst_22 = arith.constant 0.000000e+00 : f32
    %36 = vector.broadcast %cst_22 : f32 to vector<8x128xf32>
    %37 = arith.maximumf %35, %36 : vector<8x128xf32>
    %c0_23 = arith.constant 0 : index
    %c0_24 = arith.constant 0 : index
    %c0_25 = arith.constant 0 : index
    %38 = vector.load %arg8[%c0_23, %c0_24, %c0_25] : memref<2x8x128xf32, #tpu.memory_space<vmem>>, vector<1x8x128xf32>
    %39 = vector.shape_cast %38 : vector<1x8x128xf32> to vector<8x128xf32>
    %40 = vector.shape_cast %37 : vector<8x128xf32> to vector<1x8x128xf32>
    tpu.vector_store %arg8[%c0_23, %c0_24, %c0_25], %40 {strides = array<i32>} : memref<2x8x128xf32, #tpu.memory_space<vmem>>, vector<1x8x128xf32>,
    %c1 = arith.constant 1 : index
    %c0_26 = arith.constant 0 : index
    %c0_27 = arith.constant 0 : index
    %41 = vector.load %arg1[%c1, %c0_26, %c0_27] : memref<2x4x128xf32, #tpu.memory_space<vmem>>, vector<1x4x128xf32>
    %42 = vector.shape_cast %41 : vector<1x4x128xf32> to vector<4x128xf32>
    %cst_28 = arith.constant 0.000000e+00 : f32
    %43 = vector.broadcast %cst_28 : f32 to vector<4x2xf32>
    %44 = vector.extract_strided_slice %42 {offsets = [0, 0], sizes = [4, 126], strides = [1, 1]} : vector<4x128xf32> to vector<4x126xf32>
    %45 = tpu.concatenate %43, %44 in 1 : vector<4x2xf32>, vector<4x126xf32> -> vector<4x128xf32>
    %cst_29 = arith.constant 0.000000e+00 : f32
    %46 = vector.broadcast %cst_29 : f32 to vector<4x1xf32>
    %47 = vector.extract_strided_slice %42 {offsets = [0, 0], sizes = [4, 127], strides = [1, 1]} : vector<4x128xf32> to vector<4x127xf32>
    %48 = tpu.concatenate %46, %47 in 1 : vector<4x1xf32>, vector<4x127xf32> -> vector<4x128xf32>
    %49 = tpu.concatenate %45, %48, %42 in 0 : vector<4x128xf32>, vector<4x128xf32>, vector<4x128xf32> -> vector<12x128xf32>
    %cst_30 = arith.constant dense<0.000000e+00> : vector<8x128xf32>
    %50 = tpu.matmul %0, %49, %cst_30 {dimension_numbers = #tpu.dot_dimension_numbers<[1], [0], [0], [1], [0, 0, 1, 1], [], []>} : vector<8x12xf32>, vector<12x128xf32>, vector<8x128xf32> -> vector<8x128xf32>
    %51 = vector.broadcast %2 : vector<8x1xf32> to vector<8x128xf32>
    %52 = arith.addf %50, %51 : vector<8x128xf32>
    %cst_31 = arith.constant 0.000000e+00 : f32
    %53 = vector.broadcast %cst_31 : f32 to vector<8x128xf32>
    %54 = arith.maximumf %52, %53 : vector<8x128xf32>
    %cst_32 = arith.constant 0.000000e+00 : f32
    %55 = vector.broadcast %cst_32 : f32 to vector<8x2xf32>
    %56 = vector.extract_strided_slice %54 {offsets = [0, 0], sizes = [8, 126], strides = [1, 1]} : vector<8x128xf32> to vector<8x126xf32>
    %57 = tpu.concatenate %55, %56 in 1 : vector<8x2xf32>, vector<8x126xf32> -> vector<8x128xf32>
    %cst_33 = arith.constant 0.000000e+00 : f32
    %58 = vector.broadcast %cst_33 : f32 to vector<8x1xf32>
    %59 = vector.extract_strided_slice %54 {offsets = [0, 0], sizes = [8, 127], strides = [1, 1]} : vector<8x128xf32> to vector<8x127xf32>
    %60 = tpu.concatenate %58, %59 in 1 : vector<8x1xf32>, vector<8x127xf32> -> vector<8x128xf32>
    %61 = tpu.concatenate %57, %60, %54 in 0 : vector<8x128xf32>, vector<8x128xf32>, vector<8x128xf32> -> vector<24x128xf32>
    %cst_34 = arith.constant dense<0.000000e+00> : vector<8x128xf32>
    %62 = tpu.matmul %1, %61, %cst_34 {dimension_numbers = #tpu.dot_dimension_numbers<[1], [0], [0], [1], [0, 0, 1, 1], [], []>} : vector<8x24xf32>, vector<24x128xf32>, vector<8x128xf32> -> vector<8x128xf32>
    %63 = vector.broadcast %3 : vector<8x1xf32> to vector<8x128xf32>
    %64 = arith.addf %62, %63 : vector<8x128xf32>
    %cst_35 = arith.constant 0.000000e+00 : f32
    %65 = vector.broadcast %cst_35 : f32 to vector<8x128xf32>
    %66 = arith.maximumf %64, %65 : vector<8x128xf32>
    %cst_36 = arith.constant dense<0.000000e+00> : vector<8x128xf32>
    %67 = tpu.matmul %4, %42, %cst_36 {dimension_numbers = #tpu.dot_dimension_numbers<[1], [0], [0], [1], [0, 0, 1, 1], [], []>} : vector<8x4xf32>, vector<4x128xf32>, vector<8x128xf32> -> vector<8x128xf32>
    %68 = vector.broadcast %5 : vector<8x1xf32> to vector<8x128xf32>
    %69 = arith.addf %67, %68 : vector<8x128xf32>
    %70 = arith.addf %66, %69 : vector<8x128xf32>
    %cst_37 = arith.constant 0.000000e+00 : f32
    %71 = vector.broadcast %cst_37 : f32 to vector<8x128xf32>
    %72 = arith.maximumf %70, %71 : vector<8x128xf32>
    %c1_38 = arith.constant 1 : index
    %c0_39 = arith.constant 0 : index
    %c0_40 = arith.constant 0 : index
    %73 = vector.load %arg8[%c1_38, %c0_39, %c0_40] : memref<2x8x128xf32, #tpu.memory_space<vmem>>, vector<1x8x128xf32>
    %74 = vector.shape_cast %73 : vector<1x8x128xf32> to vector<8x128xf32>
    %75 = vector.shape_cast %72 : vector<8x128xf32> to vector<1x8x128xf32>
    tpu.vector_store %arg8[%c1_38, %c0_39, %c0_40], %75 {strides = array<i32>} : memref<2x8x128xf32, #tpu.memory_space<vmem>>, vector<1x8x128xf32>,
    return
  }
  func.func @transform_0(%arg0: i32) -> (i32, i32, i32) {
    %c0_i32 = arith.constant 0 : i32
    %c0_i32_0 = arith.constant 0 : i32
    %c0_i32_1 = arith.constant 0 : i32
    return %arg0, %c0_i32, %c0_i32_0 : i32, i32, i32
  }
  func.func @transform_1(%arg0: i32) -> (i32, i32) {
    %c0_i32 = arith.constant 0 : i32
    %c0_i32_0 = arith.constant 0 : i32
    %c0_i32_1 = arith.constant 0 : i32
    return %c0_i32, %c0_i32_0 : i32, i32
  }
  func.func @transform_2(%arg0: i32) -> (i32, i32) {
    %c0_i32 = arith.constant 0 : i32
    %c0_i32_0 = arith.constant 0 : i32
    %c0_i32_1 = arith.constant 0 : i32
    return %c0_i32, %c0_i32_0 : i32, i32
  }
  func.func @transform_3(%arg0: i32) -> (i32, i32) {
    %c0_i32 = arith.constant 0 : i32
    %c0_i32_0 = arith.constant 0 : i32
    %c0_i32_1 = arith.constant 0 : i32
    return %c0_i32, %c0_i32_0 : i32, i32
  }
  func.func @transform_4(%arg0: i32) -> (i32, i32) {
    %c0_i32 = arith.constant 0 : i32
    %c0_i32_0 = arith.constant 0 : i32
    %c0_i32_1 = arith.constant 0 : i32
    return %c0_i32, %c0_i32_0 : i32, i32
  }
  func.func @transform_5(%arg0: i32) -> (i32, i32) {
    %c0_i32 = arith.constant 0 : i32
    %c0_i32_0 = arith.constant 0 : i32
    %c0_i32_1 = arith.constant 0 : i32
    return %c0_i32, %c0_i32_0 : i32, i32
  }
  func.func @transform_6(%arg0: i32) -> (i32, i32) {
    %c0_i32 = arith.constant 0 : i32
    %c0_i32_0 = arith.constant 0 : i32
    %c0_i32_1 = arith.constant 0 : i32
    return %c0_i32, %c0_i32_0 : i32, i32
  }
  func.func @transform_7(%arg0: i32) -> (i32, i32, i32) {
    %c0_i32 = arith.constant 0 : i32
    %c0_i32_0 = arith.constant 0 : i32
    %c0_i32_1 = arith.constant 0 : i32
    return %arg0, %c0_i32, %c0_i32_0 : i32, i32, i32
  }
}

</mosaic_0001>

<llo_original>
// kernel: tpu_custom_call.1
$region0: #{tpu_custom_call.1}
  #allocation0 [shape = 'u32[]', space=smem, size = 0x4, offset = 0x4, fixed_abs, tag = 'smem constant byte address 0x4 - core index']
  #allocation1 [shape = 'u32[144,128]{1,0:T(1,128)}', space=vmem, size = 0x12000, scoped, tag = 'internal scratch']
  %s0 = inlined_call_operand.vmem [shape: f32[2,4,128], index: 0, kind: input, shape index: {}]
  %s1 = inlined_call_operand.vmem [shape: f32[8,12], index: 1, kind: input, shape index: {}]
  %s2 = inlined_call_operand.vmem [shape: f32[8,1], index: 2, kind: input, shape index: {}]
  %s3 = inlined_call_operand.vmem [shape: f32[8,24], index: 3, kind: input, shape index: {}]
  %s4 = inlined_call_operand.vmem [shape: f32[8,1], index: 4, kind: input, shape index: {}]
  %s5 = inlined_call_operand.vmem [shape: f32[8,4], index: 5, kind: input, shape index: {}]
  %s6 = inlined_call_operand.vmem [shape: f32[8,1], index: 6, kind: input, shape index: {}]
  %s7 = inlined_call_operand.hbm [shape: f32[2,8,128], index: 7, kind: output, shape index: {}]
  %s8 = sld [smem:[#allocation0]]
  $region38: #{tpu_custom_call.1} parent=0
    _
  %s10 = ssub.s32 1, %s8
  %s11 = scalar_select 0, %s10, %s8
  $region1: #{tpu_custom_call.1} parent=0
    #allocation2 [shape = 'u8[8192]{0}', space=vmem, size = 0x2000, scoped, tag = 'output window, operand 0, single buffered']
    #allocation3 [shape = 's32[1]{0}', space=sflag, size = 0x4, scoped, tag = 'scoped memory for tpu_custom_call.1']
    %12 = vsyncpa [#allocation3], 0
    // Predicated region
    $region2: #{tpu_custom_call.1} parent=1 // pred_check
      _
    $region3: #{tpu_custom_call.1} parent=1 // pred_check_branch
      %14 = sbr.rel (0) target = $region5
    $region4: #{tpu_custom_call.1} parent=1 // pred_region
      _
    $region5: #{tpu_custom_call.1} parent=1 // pred_fallthru
      _
    // Predicated region
    $region6: #{tpu_custom_call.1} parent=1 // pred_check
      _
    $region7: #{tpu_custom_call.1} parent=1 // pred_check_branch
      %16 = sbr.rel (0) target = $region9
    $region8: #{tpu_custom_call.1} parent=1 // pred_region
      _
    $region9: #{tpu_custom_call.1} parent=1 // pred_fallthru
      _
    // Predicated region
    $region10: #{tpu_custom_call.1} parent=1 // pred_check
      _
    $region11: #{tpu_custom_call.1} parent=1 // pred_check_branch
      %18 = sbr.rel (0) target = $region13
    $region12: #{tpu_custom_call.1} parent=1 // pred_region
      _
    $region13: #{tpu_custom_call.1} parent=1 // pred_fallthru
      _
    // Predicated region
    $region14: #{tpu_custom_call.1} parent=1 // pred_check
      _
    $region15: #{tpu_custom_call.1} parent=1 // pred_check_branch
      %20 = sbr.rel (0) target = $region17
    $region16: #{tpu_custom_call.1} parent=1 // pred_region
      _
    $region17: #{tpu_custom_call.1} parent=1 // pred_fallthru
      _
    // Predicated region
    $region18: #{tpu_custom_call.1} parent=1 // pred_check
      _
    $region19: #{tpu_custom_call.1} parent=1 // pred_check_branch
      %22 = sbr.rel (0) target = $region21
    $region20: #{tpu_custom_call.1} parent=1 // pred_region
      _
    $region21: #{tpu_custom_call.1} parent=1 // pred_fallthru
      _
    // Predicated region
    $region22: #{tpu_custom_call.1} parent=1 // pred_check
      _
    $region23: #{tpu_custom_call.1} parent=1 // pred_check_branch
      %24 = sbr.rel (0) target = $region25
    $region24: #{tpu_custom_call.1} parent=1 // pred_region
      _
    $region25: #{tpu_custom_call.1} parent=1 // pred_fallthru
      _
    // Predicated region
    $region26: #{tpu_custom_call.1} parent=1 // pred_check
      _
    $region27: #{tpu_custom_call.1} parent=1 // pred_check_branch
      %26 = sbr.rel (0) target = $region29
    $region28: #{tpu_custom_call.1} parent=1 // pred_region
      _
    $region29: #{tpu_custom_call.1} parent=1 // pred_fallthru
      _
    %v27 = vld [vmem:[%s1] sm:$0xff]
    %v28 = vld [vmem:[%s3] sm:$0xff]
    %v29 = vld [vmem:[%s2] sm:$0xff]
    %v30 = vld [vmem:[%s4] sm:$0xff]
    %v31 = vld [vmem:[%s5] sm:$0xff]
    %v32 = vld [vmem:[%s6] sm:$0xff]
    %v33 = vld [vmem:[%s0] sm:$0xf]
    %35 = vrot.lane.b32.xlu0 %v33, 2
    %v36 = vpop.permute.xlu0 %35
    %vm38 = vcmask 15360
    %v39 = vsel %vm38, 0.0, %v36
    %40 = vrot.lane.b32.xlu0 %v33, 1
    %v41 = vpop.permute.xlu0 %40
    %vm43 = vcmask 7168
    %v44 = vsel %vm43, 0.0, %v41
    %v46 = vrot.slane %v44, 4
    %vm48 = vcmask 1043456
    %v49 = vsel %vm48, %v39, %v46
    %51 = vset.pattern.permute.xlu0 0
    %52 = vperm.xlu0 %51, %v29
    %v53 = vpop.permute.xlu0 %52
    %vm55 = vcmask 97280
    %v57 = vsel %vm55, %v27, 0
    %v59 = vsel %vm48, %v33, 0
    %61 = vmatprep.subr.mxu0 0.0
    %62 = vmatpush1.msra.mxu0 %v49
    %63 = vmatprep.subr.mxu0 0.0
    %64 = vmatpush1.msra.mxu0 %v59
    %65 = vmatprep.subr.mxu0 0.0
    %66 = vmatpush1.msra.mxu0 0.0
    %67 = vmatprep.subr.mxu0 0.0
    %68 = vmatpush1.msra.mxu0 0.0
    %69 = vmatprep.subr.mxu0 0.0
    %70 = vmatpush1.msra.mxu0 0.0
    %71 = vmatprep.subr.mxu0 0.0
    %72 = vmatpush1.msra.mxu0 0.0
    %73 = vmatprep.subr.mxu0 0.0
    %74 = vmatpush1.msra.mxu0 0.0
    %75 = vmatprep.subr.mxu0 0.0
    %76 = vmatpush1.msra.mxu0 0.0
    %77 = vmatprep.subr.mxu0 0.0
    %78 = vmatpush1.msra.mxu0 0.0
    %79 = vmatprep.subr.mxu0 0.0
    %80 = vmatpush1.msra.mxu0 0.0
    %81 = vmatprep.subr.mxu0 0.0
    %82 = vmatpush1.msra.mxu0 0.0
    %83 = vmatprep.subr.mxu0 0.0
    %84 = vmatpush1.msra.mxu0 0.0
    %85 = vmatprep.subr.mxu0 0.0
    %86 = vmatpush1.msra.mxu0 0.0
    %87 = vmatprep.subr.mxu0 0.0
    %88 = vmatpush1.msra.mxu0 0.0
    %89 = vmatprep.subr.mxu0 0.0
    %90 = vmatpush1.msra.mxu0 0.0
    %91 = vmatprep.subr.mxu0 0.0
    %92 = vmatpush1.msra.mxu0 0.0
    %93 = vmatprep.subr.mxu0 0.0
    %94 = vmatpush1.msra.mxu0 0.0
    %95 = vmatprep.subr.mxu0 0.0
    %96 = vmatpush1.msra.mxu0 0.0
    %97 = vmatprep.subr.mxu0 0.0
    %98 = vmatpush1.msra.mxu0 0.0
    %99 = vmatprep.subr.mxu0 0.0
    %100 = vmatpush1.msra.mxu0 0.0
    %101 = vmatprep.subr.mxu0 0.0
    %102 = vmatpush1.msra.mxu0 0.0
    %103 = vmatprep.subr.mxu0 0.0
    %104 = vmatpush1.msra.mxu0 0.0
    %105 = vmatprep.subr.mxu0 0.0
    %106 = vmatpush1.msra.mxu0 0.0
    %107 = vmatprep.subr.mxu0 0.0
    %108 = vmatpush1.msra.mxu0 0.0
    %109 = vmatprep.subr.mxu0 0.0
    %110 = vmatpush1.msra.mxu0 0.0
    %111 = vmatprep.subr.mxu0 0.0
    %112 = vmatpush1.msra.mxu0 0.0
    %113 = vmatprep.subr.mxu0 0.0
    %114 = vmatpush1.msra.mxu0 0.0
    %115 = vmatprep.subr.mxu0 0.0
    %116 = vmatpush1.msra.mxu0 0.0
    %117 = vmatprep.subr.mxu0 0.0
    %118 = vmatpush1.msra.mxu0 0.0
    %119 = vmatprep.subr.mxu0 0.0
    %120 = vmatpush1.msra.mxu0 0.0
    %121 = vmatprep.subr.mxu0 0.0
    %122 = vmatpush1.msra.mxu0 0.0
    %123 = vmatprep.subr.mxu0 0.0
    %124 = vmatpush1.msra.mxu0 0.0
    %125 = vmatprep.mubr.f32.mxu0 0.0
    %126 = vmatmul.mubr.f32.gmra.mrb[0].mxu0 %v57
    %v127 = vpop.f32.mrb[0].mxu0
    %v128 = vadd.f32 %v53, %v127
    %v129 = vpop.f32.mrb[0].mxu0
    %130 = vdwg.mxu0
    %v131 = vmax.f32 %v128, 0.0
    %133 = vrot.lane.b32.xlu0 %v131, 2
    %v134 = vpop.permute.xlu0 %133
    %v136 = vsel %vm38, 0.0, %v134
    %137 = vrot.lane.b32.xlu0 %v131, 1
    %v138 = vpop.permute.xlu0 %137
    %v140 = vsel %vm43, 0.0, %v138
    %142 = vset.pattern.permute.xlu0 0
    %143 = vperm.xlu0 %142, %v30
    %v144 = vpop.permute.xlu0 %143
    %vm146 = vcmask 195584
    %v148 = vsel %vm146, %v28, 0
    %150 = vmatprep.subr.mxu0 0.0
    %151 = vmatpush1.msra.mxu0 %v136
    %152 = vmatprep.subr.mxu0 0.0
    %153 = vmatpush1.msra.mxu0 %v140
    %154 = vmatprep.subr.mxu0 0.0
    %155 = vmatpush1.msra.mxu0 %v131
    %156 = vmatprep.subr.mxu0 0.0
    %157 = vmatpush1.msra.mxu0 0.0
    %158 = vmatprep.subr.mxu0 0.0
    %159 = vmatpush1.msra.mxu0 0.0
    %160 = vmatprep.subr.mxu0 0.0
    %161 = vmatpush1.msra.mxu0 0.0
    %162 = vmatprep.subr.mxu0 0.0
    %163 = vmatpush1.msra.mxu0 0.0
    %164 = vmatprep.subr.mxu0 0.0
    %165 = vmatpush1.msra.mxu0 0.0
    %166 = vmatprep.subr.mxu0 0.0
    %167 = vmatpush1.msra.mxu0 0.0
    %168 = vmatprep.subr.mxu0 0.0
    %169 = vmatpush1.msra.mxu0 0.0
    %170 = vmatprep.subr.mxu0 0.0
    %171 = vmatpush1.msra.mxu0 0.0
    %172 = vmatprep.subr.mxu0 0.0
    %173 = vmatpush1.msra.mxu0 0.0
    %174 = vmatprep.subr.mxu0 0.0
    %175 = vmatpush1.msra.mxu0 0.0
    %176 = vmatprep.subr.mxu0 0.0
    %177 = vmatpush1.msra.mxu0 0.0
    %178 = vmatprep.subr.mxu0 0.0
    %179 = vmatpush1.msra.mxu0 0.0
    %180 = vmatprep.subr.mxu0 0.0
    %181 = vmatpush1.msra.mxu0 0.0
    %182 = vmatprep.subr.mxu0 0.0
    %183 = vmatpush1.msra.mxu0 0.0
    %184 = vmatprep.subr.mxu0 0.0
    %185 = vmatpush1.msra.mxu0 0.0
    %186 = vmatprep.subr.mxu0 0.0
    %187 = vmatpush1.msra.mxu0 0.0
    %188 = vmatprep.subr.mxu0 0.0
    %189 = vmatpush1.msra.mxu0 0.0
    %190 = vmatprep.subr.mxu0 0.0
    %191 = vmatpush1.msra.mxu0 0.0
    %192 = vmatprep.subr.mxu0 0.0
    %193 = vmatpush1.msra.mxu0 0.0
    %194 = vmatprep.subr.mxu0 0.0
    %195 = vmatpush1.msra.mxu0 0.0
    %196 = vmatprep.subr.mxu0 0.0
    %197 = vmatpush1.msra.mxu0 0.0
    %198 = vmatprep.subr.mxu0 0.0
    %199 = vmatpush1.msra.mxu0 0.0
    %200 = vmatprep.subr.mxu0 0.0
    %201 = vmatpush1.msra.mxu0 0.0
    %202 = vmatprep.subr.mxu0 0.0
    %203 = vmatpush1.msra.mxu0 0.0
    %204 = vmatprep.subr.mxu0 0.0
    %205 = vmatpush1.msra.mxu0 0.0
    %206 = vmatprep.subr.mxu0 0.0
    %207 = vmatpush1.msra.mxu0 0.0
    %208 = vmatprep.subr.mxu0 0.0
    %209 = vmatpush1.msra.mxu0 0.0
    %210 = vmatprep.subr.mxu0 0.0
    %211 = vmatpush1.msra.mxu0 0.0
    %212 = vmatprep.subr.mxu0 0.0
    %213 = vmatpush1.msra.mxu0 0.0
    %214 = vmatprep.mubr.f32.mxu0 0.0
    %215 = vmatmul.mubr.f32.gmra.mrb[0].mxu0 %v148
    %v216 = vpop.f32.mrb[0].mxu0
    %v217 = vadd.f32 %v144, %v216
    %v218 = vpop.f32.mrb[0].mxu0
    %219 = vdwg.mxu0
    %v220 = vmax.f32 %v217, 0.0
    %222 = vset.pattern.permute.xlu0 0
    %223 = vperm.xlu0 %222, %v32
    %v224 = vpop.permute.xlu0 %223
    %vm226 = vcmask 31744
    %v228 = vsel %vm226, %v31, 0
    %230 = vmatprep.subr.mxu0 0.0
    %231 = vmatpush1.msra.mxu0 %v59
    %232 = vmatprep.subr.mxu0 0.0
    %233 = vmatpush1.msra.mxu0 0.0
    %234 = vmatprep.subr.mxu0 0.0
    %235 = vmatpush1.msra.mxu0 0.0
    %236 = vmatprep.subr.mxu0 0.0
    %237 = vmatpush1.msra.mxu0 0.0
    %238 = vmatprep.subr.mxu0 0.0
    %239 = vmatpush1.msra.mxu0 0.0
    %240 = vmatprep.subr.mxu0 0.0
    %241 = vmatpush1.msra.mxu0 0.0
    %242 = vmatprep.subr.mxu0 0.0
    %243 = vmatpush1.msra.mxu0 0.0
    %244 = vmatprep.subr.mxu0 0.0
    %245 = vmatpush1.msra.mxu0 0.0
    %246 = vmatprep.subr.mxu0 0.0
    %247 = vmatpush1.msra.mxu0 0.0
    %248 = vmatprep.subr.mxu0 0.0
    %249 = vmatpush1.msra.mxu0 0.0
    %250 = vmatprep.subr.mxu0 0.0
    %251 = vmatpush1.msra.mxu0 0.0
    %252 = vmatprep.subr.mxu0 0.0
    %253 = vmatpush1.msra.mxu0 0.0
    %254 = vmatprep.subr.mxu0 0.0
    %255 = vmatpush1.msra.mxu0 0.0
    %256 = vmatprep.subr.mxu0 0.0
    %257 = vmatpush1.msra.mxu0 0.0
    %258 = vmatprep.subr.mxu0 0.0
    %259 = vmatpush1.msra.mxu0 0.0
    %260 = vmatprep.subr.mxu0 0.0
    %261 = vmatpush1.msra.mxu0 0.0
    %262 = vmatprep.subr.mxu0 0.0
    %263 = vmatpush1.msra.mxu0 0.0
    %264 = vmatprep.subr.mxu0 0.0
    %265 = vmatpush1.msra.mxu0 0.0
    %266 = vmatprep.subr.mxu0 0.0
    %267 = vmatpush1.msra.mxu0 0.0
    %268 = vmatprep.subr.mxu0 0.0
    %269 = vmatpush1.msra.mxu0 0.0
    %270 = vmatprep.subr.mxu0 0.0
    %271 = vmatpush1.msra.mxu0 0.0
    %272 = vmatprep.subr.mxu0 0.0
    %273 = vmatpush1.msra.mxu0 0.0
    %274 = vmatprep.subr.mxu0 0.0
    %275 = vmatpush1.msra.mxu0 0.0
    %276 = vmatprep.subr.mxu0 0.0
    %277 = vmatpush1.msra.mxu0 0.0
    %278 = vmatprep.subr.mxu0 0.0
    %279 = vmatpush1.msra.mxu0 0.0
    %280 = vmatprep.subr.mxu0 0.0
    %281 = vmatpush1.msra.mxu0 0.0
    %282 = vmatprep.subr.mxu0 0.0
    %283 = vmatpush1.msra.mxu0 0.0
    %284 = vmatprep.subr.mxu0 0.0
    %285 = vmatpush1.msra.mxu0 0.0
    %286 = vmatprep.subr.mxu0 0.0
    %287 = vmatpush1.msra.mxu0 0.0
    %288 = vmatprep.subr.mxu0 0.0
    %289 = vmatpush1.msra.mxu0 0.0
    %290 = vmatprep.subr.mxu0 0.0
    %291 = vmatpush1.msra.mxu0 0.0
    %292 = vmatprep.subr.mxu0 0.0
    %293 = vmatpush1.msra.mxu0 0.0
    %294 = vmatprep.mubr.f32.mxu0 0.0
    %295 = vmatmul.mubr.f32.gmra.mrb[0].mxu0 %v228
    %v296 = vpop.f32.mrb[0].mxu0
    %v297 = vadd.f32 %v224, %v296
    %v298 = vpop.f32.mrb[0].mxu0
    %299 = vdwg.mxu0
    %v300 = vadd.f32 %v220, %v297
    %v301 = vmax.f32 %v300, 0.0
    %302 = vst [vmem:[#allocation2] sm:$0xff] %v301
    %s303 = scalar_lea.vmem %s0, 4
    %v304 = vld [vmem:[%s303] sm:$0xf]
    %306 = vrot.lane.b32.xlu0 %v304, 2
    %v307 = vpop.permute.xlu0 %306
    %v309 = vsel %vm38, 0.0, %v307
    %310 = vrot.lane.b32.xlu0 %v304, 1
    %v311 = vpop.permute.xlu0 %310
    %v313 = vsel %vm43, 0.0, %v311
    %v315 = vrot.slane %v313, 4
    %v317 = vsel %vm48, %v309, %v315
    %v318 = vsel %vm48, %v304, 0
    %320 = vmatprep.subr.mxu0 0.0
    %321 = vmatpush1.msra.mxu0 %v317
    %322 = vmatprep.subr.mxu0 0.0
    %323 = vmatpush1.msra.mxu0 %v318
    %324 = vmatprep.subr.mxu0 0.0
    %325 = vmatpush1.msra.mxu0 0.0
    %326 = vmatprep.subr.mxu0 0.0
    %327 = vmatpush1.msra.mxu0 0.0
    %328 = vmatprep.subr.mxu0 0.0
    %329 = vmatpush1.msra.mxu0 0.0
    %330 = vmatprep.subr.mxu0 0.0
    %331 = vmatpush1.msra.mxu0 0.0
    %332 = vmatprep.subr.mxu0 0.0
    %333 = vmatpush1.msra.mxu0 0.0
    %334 = vmatprep.subr.mxu0 0.0
    %335 = vmatpush1.msra.mxu0 0.0
    %336 = vmatprep.subr.mxu0 0.0
    %337 = vmatpush1.msra.mxu0 0.0
    %338 = vmatprep.subr.mxu0 0.0
    %339 = vmatpush1.msra.mxu0 0.0
    %340 = vmatprep.subr.mxu0 0.0
    %341 = vmatpush1.msra.mxu0 0.0
    %342 = vmatprep.subr.mxu0 0.0
    %343 = vmatpush1.msra.mxu0 0.0
    %344 = vmatprep.subr.mxu0 0.0
    %345 = vmatpush1.msra.mxu0 0.0
    %346 = vmatprep.subr.mxu0 0.0
    %347 = vmatpush1.msra.mxu0 0.0
    %348 = vmatprep.subr.mxu0 0.0
    %349 = vmatpush1.msra.mxu0 0.0
    %350 = vmatprep.subr.mxu0 0.0
    %351 = vmatpush1.msra.mxu0 0.0
    %352 = vmatprep.subr.mxu0 0.0
    %353 = vmatpush1.msra.mxu0 0.0
    %354 = vmatprep.subr.mxu0 0.0
    %355 = vmatpush1.msra.mxu0 0.0
    %356 = vmatprep.subr.mxu0 0.0
    %357 = vmatpush1.msra.mxu0 0.0
    %358 = vmatprep.subr.mxu0 0.0
    %359 = vmatpush1.msra.mxu0 0.0
    %360 = vmatprep.subr.mxu0 0.0
    %361 = vmatpush1.msra.mxu0 0.0
    %362 = vmatprep.subr.mxu0 0.0
    %363 = vmatpush1.msra.mxu0 0.0
    %364 = vmatprep.subr.mxu0 0.0
    %365 = vmatpush1.msra.mxu0 0.0
    %366 = vmatprep.subr.mxu0 0.0
    %367 = vmatpush1.msra.mxu0 0.0
    %368 = vmatprep.subr.mxu0 0.0
    %369 = vmatpush1.msra.mxu0 0.0
    %370 = vmatprep.subr.mxu0 0.0
    %371 = vmatpush1.msra.mxu0 0.0
    %372 = vmatprep.subr.mxu0 0.0
    %373 = vmatpush1.msra.mxu0 0.0
    %374 = vmatprep.subr.mxu0 0.0
    %375 = vmatpush1.msra.mxu0 0.0
    %376 = vmatprep.subr.mxu0 0.0
    %377 = vmatpush1.msra.mxu0 0.0
    %378 = vmatprep.subr.mxu0 0.0
    %379 = vmatpush1.msra.mxu0 0.0
    %380 = vmatprep.subr.mxu0 0.0
    %381 = vmatpush1.msra.mxu0 0.0
    %382 = vmatprep.subr.mxu0 0.0
    %383 = vmatpush1.msra.mxu0 0.0
    %384 = vmatprep.mubr.f32.mxu0 0.0
    %385 = vmatmul.mubr.f32.gmra.mrb[0].mxu0 %v57
    %v386 = vpop.f32.mrb[0].mxu0
    %v387 = vadd.f32 %v53, %v386
    %v388 = vpop.f32.mrb[0].mxu0
    %389 = vdwg.mxu0
    %v390 = vmax.f32 %v387, 0.0
    %392 = vrot.lane.b32.xlu0 %v390, 2
    %v393 = vpop.permute.xlu0 %392
    %v395 = vsel %vm38, 0.0, %v393
    %396 = vrot.lane.b32.xlu0 %v390, 1
    %v397 = vpop.permute.xlu0 %396
    %v399 = vsel %vm43, 0.0, %v397
    %400 = vmatprep.subr.mxu0 0.0
    %401 = vmatpush1.msra.mxu0 %v395
    %402 = vmatprep.subr.mxu0 0.0
    %403 = vmatpush1.msra.mxu0 %v399
    %404 = vmatprep.subr.mxu0 0.0
    %405 = vmatpush1.msra.mxu0 %v390
    %406 = vmatprep.subr.mxu0 0.0
    %407 = vmatpush1.msra.mxu0 0.0
    %408 = vmatprep.subr.mxu0 0.0
    %409 = vmatpush1.msra.mxu0 0.0
    %410 = vmatprep.subr.mxu0 0.0
    %411 = vmatpush1.msra.mxu0 0.0
    %412 = vmatprep.subr.mxu0 0.0
    %413 = vmatpush1.msra.mxu0 0.0
    %414 = vmatprep.subr.mxu0 0.0
    %415 = vmatpush1.msra.mxu0 0.0
    %416 = vmatprep.subr.mxu0 0.0
    %417 = vmatpush1.msra.mxu0 0.0
    %418 = vmatprep.subr.mxu0 0.0
    %419 = vmatpush1.msra.mxu0 0.0
    %420 = vmatprep.subr.mxu0 0.0
    %421 = vmatpush1.msra.mxu0 0.0
    %422 = vmatprep.subr.mxu0 0.0
    %423 = vmatpush1.msra.mxu0 0.0
    %424 = vmatprep.subr.mxu0 0.0
    %425 = vmatpush1.msra.mxu0 0.0
    %426 = vmatprep.subr.mxu0 0.0
    %427 = vmatpush1.msra.mxu0 0.0
    %428 = vmatprep.subr.mxu0 0.0
    %429 = vmatpush1.msra.mxu0 0.0
    %430 = vmatprep.subr.mxu0 0.0
    %431 = vmatpush1.msra.mxu0 0.0
    %432 = vmatprep.subr.mxu0 0.0
    %433 = vmatpush1.msra.mxu0 0.0
    %434 = vmatprep.subr.mxu0 0.0
    %435 = vmatpush1.msra.mxu0 0.0
    %436 = vmatprep.subr.mxu0 0.0
    %437 = vmatpush1.msra.mxu0 0.0
    %438 = vmatprep.subr.mxu0 0.0
    %439 = vmatpush1.msra.mxu0 0.0
    %440 = vmatprep.subr.mxu0 0.0
    %441 = vmatpush1.msra.mxu0 0.0
    %442 = vmatprep.subr.mxu0 0.0
    %443 = vmatpush1.msra.mxu0 0.0
    %444 = vmatprep.subr.mxu0 0.0
    %445 = vmatpush1.msra.mxu0 0.0
    %446 = vmatprep.subr.mxu0 0.0
    %447 = vmatpush1.msra.mxu0 0.0
    %448 = vmatprep.subr.mxu0 0.0
    %449 = vmatpush1.msra.mxu0 0.0
    %450 = vmatprep.subr.mxu0 0.0
    %451 = vmatpush1.msra.mxu0 0.0
    %452 = vmatprep.subr.mxu0 0.0
    %453 = vmatpush1.msra.mxu0 0.0
    %454 = vmatprep.subr.mxu0 0.0
    %455 = vmatpush1.msra.mxu0 0.0
    %456 = vmatprep.subr.mxu0 0.0
    %457 = vmatpush1.msra.mxu0 0.0
    %458 = vmatprep.subr.mxu0 0.0
    %459 = vmatpush1.msra.mxu0 0.0
    %460 = vmatprep.subr.mxu0 0.0
    %461 = vmatpush1.msra.mxu0 0.0
    %462 = vmatprep.subr.mxu0 0.0
    %463 = vmatpush1.msra.mxu0 0.0
    %464 = vmatprep.mubr.f32.mxu0 0.0
    %465 = vmatmul.mubr.f32.gmra.mrb[0].mxu0 %v148
    %v466 = vpop.f32.mrb[0].mxu0
    %v467 = vadd.f32 %v144, %v466
    %v468 = vpop.f32.mrb[0].mxu0
    %469 = vdwg.mxu0
    %v470 = vmax.f32 %v467, 0.0
    %471 = vmatprep.subr.mxu0 0.0
    %472 = vmatpush1.msra.mxu0 %v318
    %473 = vmatprep.subr.mxu0 0.0
    %474 = vmatpush1.msra.mxu0 0.0
    %475 = vmatprep.subr.mxu0 0.0
    %476 = vmatpush1.msra.mxu0 0.0
    %477 = vmatprep.subr.mxu0 0.0
    %478 = vmatpush1.msra.mxu0 0.0
    %479 = vmatprep.subr.mxu0 0.0
    %480 = vmatpush1.msra.mxu0 0.0
    %481 = vmatprep.subr.mxu0 0.0
    %482 = vmatpush1.msra.mxu0 0.0
    %483 = vmatprep.subr.mxu0 0.0
    %484 = vmatpush1.msra.mxu0 0.0
    %485 = vmatprep.subr.mxu0 0.0
    %486 = vmatpush1.msra.mxu0 0.0
    %487 = vmatprep.subr.mxu0 0.0
    %488 = vmatpush1.msra.mxu0 0.0
    %489 = vmatprep.subr.mxu0 0.0
    %490 = vmatpush1.msra.mxu0 0.0
    %491 = vmatprep.subr.mxu0 0.0
    %492 = vmatpush1.msra.mxu0 0.0
    %493 = vmatprep.subr.mxu0 0.0
    %494 = vmatpush1.msra.mxu0 0.0
    %495 = vmatprep.subr.mxu0 0.0
    %496 = vmatpush1.msra.mxu0 0.0
    %497 = vmatprep.subr.mxu0 0.0
    %498 = vmatpush1.msra.mxu0 0.0
    %499 = vmatprep.subr.mxu0 0.0
    %500 = vmatpush1.msra.mxu0 0.0
    %501 = vmatprep.subr.mxu0 0.0
    %502 = vmatpush1.msra.mxu0 0.0
    %503 = vmatprep.subr.mxu0 0.0
    %504 = vmatpush1.msra.mxu0 0.0
    %505 = vmatprep.subr.mxu0 0.0
    %506 = vmatpush1.msra.mxu0 0.0
    %507 = vmatprep.subr.mxu0 0.0
    %508 = vmatpush1.msra.mxu0 0.0
    %509 = vmatprep.subr.mxu0 0.0
    %510 = vmatpush1.msra.mxu0 0.0
    %511 = vmatprep.subr.mxu0 0.0
    %512 = vmatpush1.msra.mxu0 0.0
    %513 = vmatprep.subr.mxu0 0.0
    %514 = vmatpush1.msra.mxu0 0.0
    %515 = vmatprep.subr.mxu0 0.0
    %516 = vmatpush1.msra.mxu0 0.0
    %517 = vmatprep.subr.mxu0 0.0
    %518 = vmatpush1.msra.mxu0 0.0
    %519 = vmatprep.subr.mxu0 0.0
    %520 = vmatpush1.msra.mxu0 0.0
    %521 = vmatprep.subr.mxu0 0.0
    %522 = vmatpush1.msra.mxu0 0.0
    %523 = vmatprep.subr.mxu0 0.0
    %524 = vmatpush1.msra.mxu0 0.0
    %525 = vmatprep.subr.mxu0 0.0
    %526 = vmatpush1.msra.mxu0 0.0
    %527 = vmatprep.subr.mxu0 0.0
    %528 = vmatpush1.msra.mxu0 0.0
    %529 = vmatprep.subr.mxu0 0.0
    %530 = vmatpush1.msra.mxu0 0.0
    %531 = vmatprep.subr.mxu0 0.0
    %532 = vmatpush1.msra.mxu0 0.0
    %533 = vmatprep.subr.mxu0 0.0
    %534 = vmatpush1.msra.mxu0 0.0
    %535 = vmatprep.mubr.f32.mxu0 0.0
    %536 = vmatmul.mubr.f32.gmra.mrb[0].mxu0 %v228
    %v537 = vpop.f32.mrb[0].mxu0
    %v538 = vadd.f32 %v224, %v537
    %v539 = vpop.f32.mrb[0].mxu0
    %540 = vdwg.mxu0
    %v541 = vadd.f32 %v470, %v538
    %v542 = vmax.f32 %v541, 0.0
    %s543 = scalar_lea.vmem [#allocation2], 8
    %544 = vst [vmem:[%s543] sm:$0xff] %v542
    // Predicated region
    $region30: #{tpu_custom_call.1} parent=1 // pred_check
      _
    $region31: #{tpu_custom_call.1} parent=1 // pred_check_branch
      %546 = sbr.rel (0) target = $region33
    $region32: #{tpu_custom_call.1} parent=1 // pred_region
      %s548 = ssub.s32 256, 256
      %549 = vsyncadd [#allocation3], %s548
      %s550 = sshll.u32 [#allocation2], 4
      %s551 = int_to_ptr.vmem [resolvable:$true] %s550
      %556 = dma.vmem_to_hbm [thread:$0]  %s551, 256, %s7, [#allocation3], 128, 128, 8
    $region33: #{tpu_custom_call.1} parent=1 // pred_fallthru
      _
    // Predicated region
    $region34: #{tpu_custom_call.1} parent=1 // pred_check
      _
    $region35: #{tpu_custom_call.1} parent=1 // pred_check_branch
      %558 = sbr.rel (0) target = $region37
    $region36: #{tpu_custom_call.1} parent=1 // pred_region
      %559 = dma.done [#allocation3], 256
    $region37: #{tpu_custom_call.1} parent=1 // pred_fallthru
      _
    %560 = vsyncpa [#allocation3], 1

</llo_original>
